<compile_context>
chip_gen: v6e
topology: v6e:2x2x1
jax: 0.10.0
libtpu: 0.0.40
codegen_flags: <defaults>
</compile_context>

<pallas_src>
import jax
import jax.numpy as jnp
from jax.experimental import pallas as pl
from jax.experimental.pallas import tpu as pltpu


_WEIGHT_BUDGET_BYTES = 8 * 1024 * 1024   # cap for the resident block-diag weight


def _round_up(a, b):
    return ((a + b - 1) // b) * b


def _cdiv(a, b):
    return -(-a // b)


def _hw_params():
    """(x_tile_target_bytes, vmem_limit_bytes) derived from the device VMEM."""
    vmem_cap = 64 << 20                      # conservative default (v7x-sized VMEM)
    try:
        info = pltpu.get_tpu_info()
        cap = getattr(info, "vmem_capacity_bytes", None)
        if cap:
            vmem_cap = int(cap)
    except Exception:
        pass
    if vmem_cap <= (64 << 20):
        # v7x: 64 MiB physical VMEM, ~3.2 TB/s HBM -> bigger tiles, headroom kept.
        return 12 << 20, 44 << 20
    # v5e / v6e: 128 MiB physical (scoped defaults 16 / 32 MiB -> keep explicit).
    return 8 << 20, 48 << 20


def _linear_kernel(x_ref, w_ref, b_ref, o_ref):
    # x_ref: (TM, L*F) VMEM  -- L original batch rows folded into the lane dim
    # w_ref: (L*F, L)  VMEM  -- block-diagonal weight, resident across steps
    # b_ref: (1,)      SMEM  -- bias scalar
    # o_ref: (TM, L)   VMEM  -- lane-dense when L == 128
    acc = jnp.dot(x_ref[...], w_ref[...], preferred_element_type=jnp.float32)
    o_ref[...] = (acc + b_ref[0]).astype(o_ref.dtype)


@jax.jit
def linear_model_forward(x, weight, bias):
    """Forward of linear_model: y = x @ weight.T + bias.

    x      : (B, F) float32
    weight : (1, F) float32  -- PyTorch nn.Linear weight layout (out, in)
    bias   : (1,)   float32
    returns: (B, 1) float32
    """
    B, F = x.shape
    dtype = x.dtype
    itemsize = jnp.dtype(dtype).itemsize

    x_tile_bytes, vmem_limit = _hw_params()

    # Fold L batch rows into the lane dimension (works for any F; lane-dense
    # when L == 128).  Cap L so the resident (L*F, L) weight stays small.
    l_cap = int((_WEIGHT_BUDGET_BYTES // (F * itemsize)) ** 0.5)
    L = max(1, min(128, B, l_cap))
    W_lanes = L * F
    G = B // L                      # folded rows handled by the kernel
    B_main = G * L                  # aligned prefix (no full-array pad)
    rem = B - B_main                # < L leftover rows -> plain jnp below

    # Folded x: row g holds original rows g*L .. g*L+L-1 (row-major flatten).
    xf = x[:B_main].reshape(G, W_lanes)

    if G < 8:
        # Tiny batch: pad the folded rows up to 8 sublanes (a few KiB at most)
        # so the MXU M-dim is conventional.  This is NOT the big batch pad the
        # perf review removed.
        Gk = 8
        xf = jnp.pad(xf, ((0, Gk - G), (0, 0)))
        TM = Gk
    else:
        Gk = G
        # Tile as large as the per-buffer budget allows, but keep >= ~4 grid
        # steps so the "parallel" axis can spread over v7x's 2 TensorCores.
        tm_bytes = max(8, (x_tile_bytes // (W_lanes * itemsize)) // 8 * 8)
        tm_balance = max(8, _round_up(_cdiv(Gk, 4), 8))
        TM = min(tm_bytes, tm_balance)
    nt = _cdiv(Gk, TM)              # edge tile (if any) is masked on writeback

    # Block-diagonal weight (L*F, L): column j holds w for folded segment j,
    # so every output lane is a real result (exact, no approximation).
    w_col = weight.reshape(F, 1).astype(dtype)
    w_blk = jnp.kron(jnp.eye(L, dtype=dtype), w_col)            # (L*F, L)
    b = bias.reshape(1).astype(dtype)

    out = pl.pallas_call(
        _linear_kernel,
        out_shape=jax.ShapeDtypeStruct((Gk, L), dtype),
        grid_spec=pltpu.PrefetchScalarGridSpec(
            num_scalar_prefetch=0,
            grid=(nt,),
            in_specs=[
                pl.BlockSpec((TM, W_lanes), lambda i: (i, 0)),        # streamed x
                pl.BlockSpec((W_lanes, L), lambda i: (0, 0)),         # resident W
                pl.BlockSpec(memory_space=pltpu.MemorySpace.SMEM),    # bias scalar
            ],
            out_specs=pl.BlockSpec((TM, L), lambda i: (i, 0)),        # lane-dense
        ),
        compiler_params=pltpu.CompilerParams(
            dimension_semantics=("parallel",),   # v7x: shard batch across 2 TCs
            vmem_limit_bytes=vmem_limit,
        ),
    )(xf, w_blk, b)

    # out[g, j] is the result for original row g*L + j -> flat order is the
    # batch order.  The final (B, 1) materialization is the consumer's layout.
    y_main = out.reshape(-1)[:B_main].reshape(B_main, 1)
    if rem == 0:
        return y_main
    # Leftover (< L) rows: cheaper as a tiny jnp matmul than padding/copying x.
    y_rem = x[B_main:] @ weight.T.astype(dtype) + bias.astype(dtype)
    return jnp.concatenate([y_main, y_rem], axis=0)


if __name__ == "__main__":
    key = jax.random.PRNGKey(0)
    k_x, k_w = jax.random.split(key)

    # Primary demo: batch=8, input_shape (in_features)=32.
    B, F = 8, 32
    x = jax.random.normal(k_x, (B, F), dtype=jnp.float32)
    # Deterministic init matching _initialize_weights(): weight~N(0,0.01), bias=0.
    weight = 0.01 * jax.random.normal(k_w, (1, F), dtype=jnp.float32)
    bias = jnp.zeros((1,), dtype=jnp.float32)

    out = jax.block_until_ready(linear_model_forward(x, weight, bias))
    ref = x @ weight.T + bias
    assert out.shape == (B, 1)
    assert jnp.allclose(out, ref, atol=1e-5, rtol=1e-5)

    # Extra validation: full L=128 lane fold, multi-tile grid with a
    # partially-valid edge tile, leftover rows, and non-divisor F.
    for Bv, Fv in ((1200, 32), (300, 48)):
        kx, kw = jax.random.split(jax.random.PRNGKey(Bv + Fv))
        xv = jax.random.normal(kx, (Bv, Fv), dtype=jnp.float32)
        wv = 0.01 * jax.random.normal(kw, (1, Fv), dtype=jnp.float32)
        bv = jnp.zeros((1,), dtype=jnp.float32)
        ov = jax.block_until_ready(linear_model_forward(xv, wv, bv))
        rv = xv @ wv.T + bv
        assert ov.shape == (Bv, 1)
        assert jnp.allclose(ov, rv, atol=1e-5, rtol=1e-5)

    print("KERNEL_OK")
</pallas_src>

<mosaic_0001>
module attributes {stable_mosaic.version = 11 : i64} {
  func.func @_linear_kernel(%arg0: i32, %arg1: memref<8x256xf32, #tpu.memory_space<vmem>>, %arg2: memref<256x8xf32, #tpu.memory_space<vmem>>, %arg3: memref<1xf32, #tpu.memory_space<smem>>, %arg4: memref<8x8xf32, #tpu.memory_space<vmem>>) attributes {dimension_semantics = [#tpu.dimension_semantics<parallel>], iteration_bounds = array<i64: 1>, scalar_prefetch = 0 : i64, scratch_operands = 0 : i64, tpu.core_type = #tpu.core_type<tc>, window_params = [{transform_indices = @transform_0, window_bounds = array<i64: 8, 256>}, {pipeline_mode = #tpu.pipeline_mode<synchronous>, transform_indices = @transform_1, window_bounds = array<i64: 256, 8>}, {transform_indices = @transform_2, window_bounds = array<i64: 1>}, {transform_indices = @transform_3, window_bounds = array<i64: 8, 8>}]} {
    %c0 = arith.constant 0 : index
    %c0_0 = arith.constant 0 : index
    %0 = vector.load %arg1[%c0, %c0_0] : memref<8x256xf32, #tpu.memory_space<vmem>>, vector<8x256xf32>
    %c0_1 = arith.constant 0 : index
    %c0_2 = arith.constant 0 : index
    %1 = vector.load %arg2[%c0_1, %c0_2] : memref<256x8xf32, #tpu.memory_space<vmem>>, vector<256x8xf32>
    %cst = arith.constant dense<0.000000e+00> : vector<8x8xf32>
    %2 = tpu.matmul %0, %1, %cst {dimension_numbers = #tpu.dot_dimension_numbers<[1], [0], [0], [1], [0, 0, 1, 1], [], []>} : vector<8x256xf32>, vector<256x8xf32>, vector<8x8xf32> -> vector<8x8xf32>
    %c0_3 = arith.constant 0 : index
    %3 = memref.load %arg3[%c0_3] : memref<1xf32, #tpu.memory_space<smem>>
    %4 = vector.broadcast %3 : f32 to vector<8x8xf32>
    %5 = arith.addf %2, %4 : vector<8x8xf32>
    %c0_4 = arith.constant 0 : index
    %c0_5 = arith.constant 0 : index
    %6 = vector.load %arg4[%c0_4, %c0_5] : memref<8x8xf32, #tpu.memory_space<vmem>>, vector<8x8xf32>
    tpu.vector_store %arg4[%c0_4, %c0_5], %5 {strides = array<i32>} : memref<8x8xf32, #tpu.memory_space<vmem>>, vector<8x8xf32>,
    return
  }
  func.func @transform_0(%arg0: i32) -> (i32, i32) {
    %c0_i32 = arith.constant 0 : i32
    %c0_i32_0 = arith.constant 0 : i32
    return %arg0, %c0_i32 : i32, i32
  }
  func.func @transform_1(%arg0: i32) -> (i32, i32) {
    %c0_i32 = arith.constant 0 : i32
    %c0_i32_0 = arith.constant 0 : i32
    %c0_i32_1 = arith.constant 0 : i32
    return %c0_i32, %c0_i32_0 : i32, i32
  }
  func.func @transform_2(%arg0: i32) -> i32 {
    %c0_i32 = arith.constant 0 : i32
    %c0_i32_0 = arith.constant 0 : i32
    return %c0_i32 : i32
  }
  func.func @transform_3(%arg0: i32) -> (i32, i32) {
    %c0_i32 = arith.constant 0 : i32
    %c0_i32_0 = arith.constant 0 : i32
    return %arg0, %c0_i32 : i32, i32
  }
}

</mosaic_0001>

<llo_original>
// kernel: linear_model_forward.1
$region0: #{linear_model_forward.1}
  #allocation0 [shape = 'u32[]', space=smem, size = 0x4, offset = 0x4, fixed_abs, tag = 'smem constant byte address 0x4 - core index']
  #allocation1 [shape = 'u32[144,128]{1,0:T(1,128)}', space=vmem, size = 0x12000, scoped, tag = 'internal scratch']
  #allocation2 [shape = 'f32[1]{0:T(128)S(6)}', space=smem, size = 0x200, scoped, tag = 'scoped memory for linear_model_forward.1']
  %s0 = inlined_call_operand.vmem [shape: f32[8,256], index: 0, kind: input, shape index: {}]
  %s1 = inlined_call_operand.vmem [shape: f32[256,8], index: 1, kind: input, shape index: {}]
  %s2 = inlined_call_operand.<no memory space> [shape: f32[1], index: 2, kind: input, shape index: {}]
  %s3 = inlined_call_operand.vmem [shape: f32[8,8], index: 3, kind: output, shape index: {}]
  %s4 = sld [smem:[#allocation0]]
  $region22: #{linear_model_forward.1} parent=0
    _
  %s6 = ssub.s32 1, %s4
  %s7 = scalar_select 0, %s6, %s4
  %8 = sst [smem:[#allocation2]] %s2
  // Predicated region
  $region2: #{linear_model_forward.1} parent=0 // pred_check
    _
  $region3: #{linear_model_forward.1} parent=0 // pred_check_branch
    %10 = sbr.rel (0) target = $region5
  $region4: #{linear_model_forward.1} parent=0 // pred_region
    _
  $region5: #{linear_model_forward.1} parent=0 // pred_fallthru
    _
  // Predicated region
  $region6: #{linear_model_forward.1} parent=0 // pred_check
    _
  $region7: #{linear_model_forward.1} parent=0 // pred_check_branch
    %12 = sbr.rel (0) target = $region9
  $region8: #{linear_model_forward.1} parent=0 // pred_region
    _
  $region9: #{linear_model_forward.1} parent=0 // pred_fallthru
    _
  // Predicated region
  $region10: #{linear_model_forward.1} parent=0 // pred_check
    _
  $region11: #{linear_model_forward.1} parent=0 // pred_check_branch
    %14 = sbr.rel (0) target = $region13
  $region12: #{linear_model_forward.1} parent=0 // pred_region
    _
  $region13: #{linear_model_forward.1} parent=0 // pred_fallthru
    _
  %v15 = vld [vmem:[%s0] sm:$0xff]
  %v16 = vld [vmem:[%s0 + $0x8] sm:$0xff]
  %v17 = vld [vmem:[%s1] sm:$0xff]
  %v18 = vld [vmem:[%s1 + $0x8] sm:$0xff]
  %v19 = vld [vmem:[%s1 + $0x10] sm:$0xff]
  %v20 = vld [vmem:[%s1 + $0x18] sm:$0xff]
  %v21 = vld [vmem:[%s1 + $0x20] sm:$0xff]
  %v22 = vld [vmem:[%s1 + $0x28] sm:$0xff]
  %v23 = vld [vmem:[%s1 + $0x30] sm:$0xff]
  %v24 = vld [vmem:[%s1 + $0x38] sm:$0xff]
  %v25 = vld [vmem:[%s1 + $0x40] sm:$0xff]
  %v26 = vld [vmem:[%s1 + $0x48] sm:$0xff]
  %v27 = vld [vmem:[%s1 + $0x50] sm:$0xff]
  %v28 = vld [vmem:[%s1 + $0x58] sm:$0xff]
  %v29 = vld [vmem:[%s1 + $0x60] sm:$0xff]
  %v30 = vld [vmem:[%s1 + $0x68] sm:$0xff]
  %v31 = vld [vmem:[%s1 + $0x70] sm:$0xff]
  %v32 = vld [vmem:[%s1 + $0x78] sm:$0xff]
  %v33 = vld [vmem:[%s1 + $0x80] sm:$0xff]
  %v34 = vld [vmem:[%s1 + $0x88] sm:$0xff]
  %v35 = vld [vmem:[%s1 + $0x90] sm:$0xff]
  %v36 = vld [vmem:[%s1 + $0x98] sm:$0xff]
  %v37 = vld [vmem:[%s1 + $0xa0] sm:$0xff]
  %v38 = vld [vmem:[%s1 + $0xa8] sm:$0xff]
  %v39 = vld [vmem:[%s1 + $0xb0] sm:$0xff]
  %v40 = vld [vmem:[%s1 + $0xb8] sm:$0xff]
  %v41 = vld [vmem:[%s1 + $0xc0] sm:$0xff]
  %v42 = vld [vmem:[%s1 + $0xc8] sm:$0xff]
  %v43 = vld [vmem:[%s1 + $0xd0] sm:$0xff]
  %v44 = vld [vmem:[%s1 + $0xd8] sm:$0xff]
  %v45 = vld [vmem:[%s1 + $0xe0] sm:$0xff]
  %v46 = vld [vmem:[%s1 + $0xe8] sm:$0xff]
  %v47 = vld [vmem:[%s1 + $0xf0] sm:$0xff]
  %v48 = vld [vmem:[%s1 + $0xf8] sm:$0xff]
  %s49 = sld [smem:[#allocation2]]
  %v50 = vstv %s49
  %51 = vmatprep.subr.mxu0 0.0
  %52 = vmatpush1.msra.mxu0 %v32
  %53 = vmatprep.subr.mxu0 0.0
  %54 = vmatpush1.msra.mxu0 %v31
  %55 = vmatprep.subr.mxu0 0.0
  %56 = vmatpush1.msra.mxu0 %v30
  %57 = vmatprep.subr.mxu0 0.0
  %58 = vmatpush1.msra.mxu0 %v29
  %59 = vmatprep.subr.mxu0 0.0
  %60 = vmatpush1.msra.mxu0 %v28
  %61 = vmatprep.subr.mxu0 0.0
  %62 = vmatpush1.msra.mxu0 %v27
  %63 = vmatprep.subr.mxu0 0.0
  %64 = vmatpush1.msra.mxu0 %v26
  %65 = vmatprep.subr.mxu0 0.0
  %66 = vmatpush1.msra.mxu0 %v25
  %67 = vmatprep.subr.mxu0 0.0
  %68 = vmatpush1.msra.mxu0 %v24
  %69 = vmatprep.subr.mxu0 0.0
  %70 = vmatpush1.msra.mxu0 %v23
  %71 = vmatprep.subr.mxu0 0.0
  %72 = vmatpush1.msra.mxu0 %v22
  %73 = vmatprep.subr.mxu0 0.0
  %74 = vmatpush1.msra.mxu0 %v21
  %75 = vmatprep.subr.mxu0 0.0
  %76 = vmatpush1.msra.mxu0 %v20
  %77 = vmatprep.subr.mxu0 0.0
  %78 = vmatpush1.msra.mxu0 %v19
  %79 = vmatprep.subr.mxu0 0.0
  %80 = vmatpush1.msra.mxu0 %v18
  %81 = vmatprep.subr.mxu0 0.0
  %82 = vmatpush1.msra.mxu0 %v17
  %83 = vmatprep.subr.mxu0 0.0
  %84 = vmatpush2.msra.mxu0 %v48
  %85 = vmatprep.subr.mxu0 0.0
  %86 = vmatpush2.msra.mxu0 %v47
  %87 = vmatprep.subr.mxu0 0.0
  %88 = vmatpush2.msra.mxu0 %v46
  %89 = vmatprep.subr.mxu0 0.0
  %90 = vmatpush2.msra.mxu0 %v45
  %91 = vmatprep.subr.mxu0 0.0
  %92 = vmatpush2.msra.mxu0 %v44
  %93 = vmatprep.subr.mxu0 0.0
  %94 = vmatpush2.msra.mxu0 %v43
  %95 = vmatprep.subr.mxu0 0.0
  %96 = vmatpush2.msra.mxu0 %v42
  %97 = vmatprep.subr.mxu0 0.0
  %98 = vmatpush2.msra.mxu0 %v41
  %99 = vmatprep.subr.mxu0 0.0
  %100 = vmatpush2.msra.mxu0 %v40
  %101 = vmatprep.subr.mxu0 0.0
  %102 = vmatpush2.msra.mxu0 %v39
  %103 = vmatprep.subr.mxu0 0.0
  %104 = vmatpush2.msra.mxu0 %v38
  %105 = vmatprep.subr.mxu0 0.0
  %106 = vmatpush2.msra.mxu0 %v37
  %107 = vmatprep.subr.mxu0 0.0
  %108 = vmatpush2.msra.mxu0 %v36
  %109 = vmatprep.subr.mxu0 0.0
  %110 = vmatpush2.msra.mxu0 %v35
  %111 = vmatprep.subr.mxu0 0.0
  %112 = vmatpush2.msra.mxu0 %v34
  %113 = vmatprep.subr.mxu0 0.0
  %114 = vmatpush2.msra.mxu0 %v33
  %115 = vmatprep.mubr.f32.mxu0 %v16
  %116 = vmatmul.mubr.f32.gmra.mxu0 %v15
  %v117 = vpop.f32.mrf.mxu0
  %v118 = vadd.f32 %v50, %v117
  %v119 = vpop.f32.mrf.mxu0
  %120 = vdwg.mxu0
  %vm121 = vcmask 64512
  %122 = vst.msk [vmem:[%s3] sm:$0xff] %vm121, %v118
  // Predicated region
  $region14: #{linear_model_forward.1} parent=0 // pred_check
    _
  $region15: #{linear_model_forward.1} parent=0 // pred_check_branch
    %124 = sbr.rel (0) target = $region17
  $region16: #{linear_model_forward.1} parent=0 // pred_region
    _
  $region17: #{linear_model_forward.1} parent=0 // pred_fallthru
    _
  // Predicated region
  $region18: #{linear_model_forward.1} parent=0 // pred_check
    _
  $region19: #{linear_model_forward.1} parent=0 // pred_check_branch
    %126 = sbr.rel (0) target = $region21
  $region20: #{linear_model_forward.1} parent=0 // pred_region
    _
  $region21: #{linear_model_forward.1} parent=0 // pred_fallthru
    _

</llo_original>
